<compile_context>
chip_gen: v7x
topology: tpu7x:2x2x1
jax: 0.10.0
libtpu: 0.0.40
codegen_flags: <defaults>
</compile_context>

<pallas_src>
import functools

import jax
import jax.numpy as jnp
from jax import lax
from jax.experimental import pallas as pl
from jax.experimental.pallas import tpu as pltpu

HEAD_PAD = 128   # lane-dense width of the fused policy+value head output
SUBLANE = 8      # f32 sublane count
TM_MAX = 512     # max batch-tile rows per grid step


def a3c_kernel(x_ref, w1_ref, b1_ref, wh_ref, bh_ref, out_ref, *, action_dim):
    x = x_ref[...]            # (TM, in_dim)   in_dim is tiny (3)
    w1 = w1_ref[...]          # (in_dim, 128)

    # fc1 + ReLU as a VPU broadcast-FMA over the tiny, static K dimension.
    h = b1_ref[...]           # (1, 128) -> broadcasts over the batch rows
    for i in range(x.shape[1]):
        h = h + x[:, i:i + 1] * w1[i:i + 1, :]
    h = jnp.maximum(h, 0.0)                                          # (TM, 128)

    # Fused policy+value head: one lane-dense MXU matmul, f32 accumulation.
    z = jnp.dot(h, wh_ref[...], preferred_element_type=jnp.float32) + bh_ref[...]

    lane = lax.broadcasted_iota(jnp.int32, z.shape, 1)
    is_logit = lane < action_dim

    # Softmax over the A logit lanes only (padded lanes masked out of both
    # the max and the sum).
    m = jnp.max(jnp.where(is_logit, z, -jnp.inf), axis=-1, keepdims=True)
    e = jnp.where(is_logit, jnp.exp(z - m), 0.0)
    denom = jnp.sum(e, axis=-1, keepdims=True)
    probs = e * pl.reciprocal(denom, approx=True)        # EUP recip + VALU mul

    # Lane-dense packed output: probs in lanes [0, A), value in lane A,
    # zeros elsewhere -> single unmasked vector store.
    value_lane = jnp.where(lane == action_dim, z, 0.0)
    out_ref[...] = probs + value_lane


def a3c_chunk_selector(x, params):
    """x: (B, input_dim) f32.  params: (w1, b1, wp, bp, wv, bv) with weights
    stored (in, out) and biases (1, out).  Returns (probs (B, A), value (B, 1))."""
    w1, b1, wp, bp, wv, bv = params
    B, in_dim = x.shape
    hidden = w1.shape[1]
    action_dim = wp.shape[1]
    assert action_dim + 1 <= HEAD_PAD

    # Fuse the two heads into one zero-padded lane-dense weight / bias.
    wh = jnp.pad(jnp.concatenate([wp, wv], axis=1),
                 ((0, 0), (0, HEAD_PAD - action_dim - 1)))
    bh = jnp.pad(jnp.concatenate([bp, bv], axis=1),
                 ((0, 0), (0, HEAD_PAD - action_dim - 1)))

    # Pad batch to a sublane multiple and pick a batch tile.
    Bp = max(SUBLANE, -(-B // SUBLANE) * SUBLANE)
    TM = min(Bp, TM_MAX)
    Bp = -(-Bp // TM) * TM
    x_pad = x if Bp == B else jnp.pad(x, ((0, Bp - B), (0, 0)))

    grid = (Bp // TM,)
    out = pl.pallas_call(
        functools.partial(a3c_kernel, action_dim=action_dim),
        out_shape=jax.ShapeDtypeStruct((Bp, HEAD_PAD), jnp.float32),
        grid=grid,
        in_specs=[
            pl.BlockSpec((TM, in_dim), lambda i: (i, 0)),          # x tile
            pl.BlockSpec((in_dim, hidden), lambda i: (0, 0)),      # w1 (resident)
            pl.BlockSpec((1, hidden), lambda i: (0, 0)),           # b1
            pl.BlockSpec((hidden, HEAD_PAD), lambda i: (0, 0)),    # fused head W
            pl.BlockSpec((1, HEAD_PAD), lambda i: (0, 0)),         # fused head b
        ],
        out_specs=pl.BlockSpec((TM, HEAD_PAD), lambda i: (i, 0)),
        compiler_params=pltpu.CompilerParams(
            dimension_semantics=("parallel",)),
    )(x_pad, w1, b1, wh, bh)

    probs = out[:B, :action_dim]
    value = out[:B, action_dim:action_dim + 1]
    return probs, value


def init_params(key, input_dim=3, hidden=128, action_dim=4):
    """Deterministic init mimicking PyTorch nn.Linear defaults
    (uniform(-1/sqrt(fan_in), 1/sqrt(fan_in)) for weight and bias)."""
    ks = jax.random.split(key, 6)

    def lin(kw, kb, fan_in, fan_out):
        bound = 1.0 / jnp.sqrt(jnp.float32(fan_in))
        w = jax.random.uniform(kw, (fan_in, fan_out), jnp.float32, -bound, bound)
        b = jax.random.uniform(kb, (1, fan_out), jnp.float32, -bound, bound)
        return w, b

    w1, b1 = lin(ks[0], ks[1], input_dim, hidden)
    wp, bp = lin(ks[2], ks[3], hidden, action_dim)
    wv, bv = lin(ks[4], ks[5], hidden, 1)
    return (w1, b1, wp, bp, wv, bv)


if __name__ == "__main__":
    key = jax.random.PRNGKey(0)
    k_x, k_p = jax.random.split(key)

    B, input_dim, action_dim = 2, 3, 4
    x = jax.random.normal(k_x, (B, input_dim), dtype=jnp.float32)
    params = init_params(k_p, input_dim=input_dim, hidden=128, action_dim=action_dim)

    probs, value = a3c_chunk_selector(x, params)
    jax.block_until_ready((probs, value))

    # sanity: reference in plain JAX
    w1, b1, wp, bp, wv, bv = params
    h_ref = jnp.maximum(x @ w1 + b1, 0.0)
    probs_ref = jax.nn.softmax(h_ref @ wp + bp, axis=-1)
    value_ref = h_ref @ wv + bv

    assert probs.shape == (B, action_dim) and value.shape == (B, 1)
    # probs go through the EUP approximate reciprocal -> slightly looser tolerance.
    assert jnp.allclose(probs, probs_ref, atol=2e-3)
    assert jnp.allclose(jnp.sum(probs, axis=-1), 1.0, atol=2e-3)
    assert jnp.allclose(value, value_ref, atol=1e-4)

    print("KERNEL_OK")
</pallas_src>

<mosaic_0001>
module attributes {stable_mosaic.version = 11 : i64} {
  func.func @a3c_kernel(%arg0: i32, %arg1: memref<8x3xf32, #tpu.memory_space<vmem>>, %arg2: memref<3x128xf32, #tpu.memory_space<vmem>>, %arg3: memref<1x128xf32, #tpu.memory_space<vmem>>, %arg4: memref<128x128xf32, #tpu.memory_space<vmem>>, %arg5: memref<1x128xf32, #tpu.memory_space<vmem>>, %arg6: memref<8x128xf32, #tpu.memory_space<vmem>>) attributes {dimension_semantics = [#tpu.dimension_semantics<parallel>], iteration_bounds = array<i64: 1>, scalar_prefetch = 0 : i64, scratch_operands = 0 : i64, tpu.core_type = #tpu.core_type<tc>, window_params = [{transform_indices = @transform_0, window_bounds = array<i64: 8, 3>}, {pipeline_mode = #tpu.pipeline_mode<synchronous>, transform_indices = @transform_1, window_bounds = array<i64: 3, 128>}, {pipeline_mode = #tpu.pipeline_mode<synchronous>, transform_indices = @transform_2, window_bounds = array<i64: 1, 128>}, {pipeline_mode = #tpu.pipeline_mode<synchronous>, transform_indices = @transform_3, window_bounds = array<i64: 128, 128>}, {pipeline_mode = #tpu.pipeline_mode<synchronous>, transform_indices = @transform_4, window_bounds = array<i64: 1, 128>}, {transform_indices = @transform_5, window_bounds = array<i64: 8, 128>}]} {
    %c0 = arith.constant 0 : index
    %c0_0 = arith.constant 0 : index
    %0 = vector.load %arg1[%c0, %c0_0] : memref<8x3xf32, #tpu.memory_space<vmem>>, vector<8x3xf32>
    %c0_1 = arith.constant 0 : index
    %c0_2 = arith.constant 0 : index
    %1 = vector.load %arg2[%c0_1, %c0_2] : memref<3x128xf32, #tpu.memory_space<vmem>>, vector<3x128xf32>
    %c0_3 = arith.constant 0 : index
    %c0_4 = arith.constant 0 : index
    %2 = vector.load %arg3[%c0_3, %c0_4] : memref<1x128xf32, #tpu.memory_space<vmem>>, vector<1x128xf32>
    %3 = vector.extract_strided_slice %0 {offsets = [0, 0], sizes = [8, 1], strides = [1, 1]} : vector<8x3xf32> to vector<8x1xf32>
    %4 = vector.extract_strided_slice %1 {offsets = [0, 0], sizes = [1, 128], strides = [1, 1]} : vector<3x128xf32> to vector<1x128xf32>
    %5 = vector.broadcast %3 : vector<8x1xf32> to vector<8x128xf32>
    %6 = vector.broadcast %4 : vector<1x128xf32> to vector<8x128xf32>
    %7 = arith.mulf %5, %6 : vector<8x128xf32>
    %8 = vector.broadcast %2 : vector<1x128xf32> to vector<8x128xf32>
    %9 = arith.addf %8, %7 : vector<8x128xf32>
    %10 = vector.extract_strided_slice %0 {offsets = [0, 1], sizes = [8, 1], strides = [1, 1]} : vector<8x3xf32> to vector<8x1xf32>
    %11 = vector.extract_strided_slice %1 {offsets = [1, 0], sizes = [1, 128], strides = [1, 1]} : vector<3x128xf32> to vector<1x128xf32>
    %12 = vector.broadcast %10 : vector<8x1xf32> to vector<8x128xf32>
    %13 = vector.broadcast %11 : vector<1x128xf32> to vector<8x128xf32>
    %14 = arith.mulf %12, %13 : vector<8x128xf32>
    %15 = arith.addf %9, %14 : vector<8x128xf32>
    %16 = vector.extract_strided_slice %0 {offsets = [0, 2], sizes = [8, 1], strides = [1, 1]} : vector<8x3xf32> to vector<8x1xf32>
    %17 = vector.extract_strided_slice %1 {offsets = [2, 0], sizes = [1, 128], strides = [1, 1]} : vector<3x128xf32> to vector<1x128xf32>
    %18 = vector.broadcast %16 : vector<8x1xf32> to vector<8x128xf32>
    %19 = vector.broadcast %17 : vector<1x128xf32> to vector<8x128xf32>
    %20 = arith.mulf %18, %19 : vector<8x128xf32>
    %21 = arith.addf %15, %20 : vector<8x128xf32>
    %cst = arith.constant 0.000000e+00 : f32
    %22 = vector.broadcast %cst : f32 to vector<8x128xf32>
    %23 = arith.maximumf %21, %22 : vector<8x128xf32>
    %c0_5 = arith.constant 0 : index
    %c0_6 = arith.constant 0 : index
    %24 = vector.load %arg4[%c0_5, %c0_6] : memref<128x128xf32, #tpu.memory_space<vmem>>, vector<128x128xf32>
    %cst_7 = arith.constant dense<0.000000e+00> : vector<8x128xf32>
    %25 = tpu.matmul %23, %24, %cst_7 {dimension_numbers = #tpu.dot_dimension_numbers<[1], [0], [0], [1], [0, 0, 1, 1], [], []>} : vector<8x128xf32>, vector<128x128xf32>, vector<8x128xf32> -> vector<8x128xf32>
    %c0_8 = arith.constant 0 : index
    %c0_9 = arith.constant 0 : index
    %26 = vector.load %arg5[%c0_8, %c0_9] : memref<1x128xf32, #tpu.memory_space<vmem>>, vector<1x128xf32>
    %27 = vector.broadcast %26 : vector<1x128xf32> to vector<8x128xf32>
    %28 = arith.addf %25, %27 : vector<8x128xf32>
    %29 = tpu.iota {dimensions = array<i32: 1>} : vector<8x128xi32>
    %c4_i32 = arith.constant 4 : i32
    %30 = vector.broadcast %c4_i32 : i32 to vector<8x128xi32>
    %31 = arith.cmpi slt, %29, %30 : vector<8x128xi32>
    %cst_10 = arith.constant 0xFF800000 : f32
    %32 = vector.broadcast %cst_10 : f32 to vector<8x128xf32>
    %33 = arith.select %31, %28, %32 : vector<8x128xi1>, vector<8x128xf32>
    %cst_11 = arith.constant dense<0xFF800000> : vector<8xf32>
    %34 = vector.multi_reduction <maximumf>, %33, %cst_11 [1] : vector<8x128xf32> to vector<8xf32>
    %35 = vector.shape_cast %34 : vector<8xf32> to vector<8x1xf32>
    %36 = vector.broadcast %35 : vector<8x1xf32> to vector<8x128xf32>
    %37 = arith.subf %28, %36 : vector<8x128xf32>
    %38 = math.exp %37 : vector<8x128xf32>
    %cst_12 = arith.constant 0.000000e+00 : f32
    %39 = vector.broadcast %cst_12 : f32 to vector<8x128xf32>
    %40 = arith.select %31, %38, %39 : vector<8x128xi1>, vector<8x128xf32>
    %cst_13 = arith.constant dense<0.000000e+00> : vector<8xf32>
    %41 = vector.multi_reduction <add>, %40, %cst_13 [1] : vector<8x128xf32> to vector<8xf32>
    %42 = vector.shape_cast %41 : vector<8xf32> to vector<8x1xf32>
    %43 = tpu.reciprocal %42 {approx = true} : vector<8x1xf32> -> vector<8x1xf32>
    %44 = vector.broadcast %43 : vector<8x1xf32> to vector<8x128xf32>
    %45 = arith.mulf %40, %44 : vector<8x128xf32>
    %c4_i32_14 = arith.constant 4 : i32
    %46 = vector.broadcast %c4_i32_14 : i32 to vector<8x128xi32>
    %47 = arith.cmpi eq, %29, %46 : vector<8x128xi32>
    %cst_15 = arith.constant 0.000000e+00 : f32
    %48 = vector.broadcast %cst_15 : f32 to vector<8x128xf32>
    %49 = arith.select %47, %28, %48 : vector<8x128xi1>, vector<8x128xf32>
    %50 = arith.addf %45, %49 : vector<8x128xf32>
    %c0_16 = arith.constant 0 : index
    %c0_17 = arith.constant 0 : index
    %51 = vector.load %arg6[%c0_16, %c0_17] : memref<8x128xf32, #tpu.memory_space<vmem>>, vector<8x128xf32>
    tpu.vector_store %arg6[%c0_16, %c0_17], %50 {strides = array<i32>} : memref<8x128xf32, #tpu.memory_space<vmem>>, vector<8x128xf32>,
    return
  }
  func.func @transform_0(%arg0: i32) -> (i32, i32) {
    %c0_i32 = arith.constant 0 : i32
    %c0_i32_0 = arith.constant 0 : i32
    return %arg0, %c0_i32 : i32, i32
  }
  func.func @transform_1(%arg0: i32) -> (i32, i32) {
    %c0_i32 = arith.constant 0 : i32
    %c0_i32_0 = arith.constant 0 : i32
    %c0_i32_1 = arith.constant 0 : i32
    return %c0_i32, %c0_i32_0 : i32, i32
  }
  func.func @transform_2(%arg0: i32) -> (i32, i32) {
    %c0_i32 = arith.constant 0 : i32
    %c0_i32_0 = arith.constant 0 : i32
    %c0_i32_1 = arith.constant 0 : i32
    return %c0_i32, %c0_i32_0 : i32, i32
  }
  func.func @transform_3(%arg0: i32) -> (i32, i32) {
    %c0_i32 = arith.constant 0 : i32
    %c0_i32_0 = arith.constant 0 : i32
    %c0_i32_1 = arith.constant 0 : i32
    return %c0_i32, %c0_i32_0 : i32, i32
  }
  func.func @transform_4(%arg0: i32) -> (i32, i32) {
    %c0_i32 = arith.constant 0 : i32
    %c0_i32_0 = arith.constant 0 : i32
    %c0_i32_1 = arith.constant 0 : i32
    return %c0_i32, %c0_i32_0 : i32, i32
  }
  func.func @transform_5(%arg0: i32) -> (i32, i32) {
    %c0_i32 = arith.constant 0 : i32
    %c0_i32_0 = arith.constant 0 : i32
    return %arg0, %c0_i32 : i32, i32
  }
}

</mosaic_0001>

<llo_original>
// kernel: tpu_custom_call.1
$region0: #{tpu_custom_call.1}
  #allocation0 [shape = 'u32[]', space=smem, size = 0x4, offset = 0x4, fixed_abs, tag = 'smem constant byte address 0x4 - core index']
  #allocation1 [shape = 'u32[144,128]{1,0:T(1,128)}', space=vmem, size = 0x12000, scoped, tag = 'internal scratch']
  %s0 = inlined_call_operand.vmem [shape: f32[8,3], index: 0, kind: input, shape index: {}]
  %s1 = inlined_call_operand.vmem [shape: f32[3,128], index: 1, kind: input, shape index: {}]
  %s2 = inlined_call_operand.vmem [shape: f32[1,128], index: 2, kind: input, shape index: {}]
  %s3 = inlined_call_operand.hbm [shape: f32[128,128], index: 3, kind: input, shape index: {}]
  %s4 = inlined_call_operand.vmem [shape: f32[1,128], index: 4, kind: input, shape index: {}]
  %s5 = inlined_call_operand.hbm [shape: f32[8,128], index: 5, kind: output, shape index: {}]
  %s6 = sld [smem:[#allocation0]]
  $region34: #{tpu_custom_call.1} parent=0
    _
  %s8 = ssub.s32 1, %s6
  %s9 = scalar_select 0, %s8, %s6
  $region1: #{tpu_custom_call.1} parent=0
    #allocation2 [shape = 'u8[65536]{0}', space=vmem, size = 0x10000, scoped, tag = 'input window, operand 3, single buffered']
    #allocation3 [shape = 's32[1]{0}', space=sflag, size = 0x4, scoped, tag = 'scoped memory for tpu_custom_call.1']
    #allocation4 [shape = 's32[1]{0}', space=sflag, size = 0x4, scoped, tag = 'scoped memory for tpu_custom_call.1']
    #allocation5 [shape = 'u8[4096]{0}', space=vmem, size = 0x1000, scoped, tag = 'output window, operand 0, single buffered']
    %10 = vsyncpa [#allocation3], 0
    %11 = vsyncpa [#allocation4], 0
    // Predicated region
    $region2: #{tpu_custom_call.1} parent=1 // pred_check
      _
    $region3: #{tpu_custom_call.1} parent=1 // pred_check_branch
      %13 = sbr.rel (0) target = $region5
    $region4: #{tpu_custom_call.1} parent=1 // pred_region
      _
    $region5: #{tpu_custom_call.1} parent=1 // pred_fallthru
      _
    // Predicated region
    $region6: #{tpu_custom_call.1} parent=1 // pred_check
      _
    $region7: #{tpu_custom_call.1} parent=1 // pred_check_branch
      %15 = sbr.rel (0) target = $region9
    $region8: #{tpu_custom_call.1} parent=1 // pred_region
      _
    $region9: #{tpu_custom_call.1} parent=1 // pred_fallthru
      _
    // Predicated region
    $region10: #{tpu_custom_call.1} parent=1 // pred_check
      _
    $region11: #{tpu_custom_call.1} parent=1 // pred_check_branch
      %17 = sbr.rel (0) target = $region13
    $region12: #{tpu_custom_call.1} parent=1 // pred_region
      _
    $region13: #{tpu_custom_call.1} parent=1 // pred_fallthru
      _
    // Predicated region
    $region14: #{tpu_custom_call.1} parent=1 // pred_check
      _
    $region15: #{tpu_custom_call.1} parent=1 // pred_check_branch
      %19 = sbr.rel (0) target = $region17
    $region16: #{tpu_custom_call.1} parent=1 // pred_region
      %s21 = ssub.s32 2048, 2048
      %22 = vsyncadd [#allocation3], %s21
      %s23 = sshll.u32 [#allocation2], 4
      %s24 = int_to_ptr.vmem [resolvable:$true] %s23
      %29 = dma.hbm_to_vmem [thread:$0]  %s3, 2048, %s24, [#allocation3], 128, 128, 8
    $region17: #{tpu_custom_call.1} parent=1 // pred_fallthru
      _
    // Predicated region
    $region18: #{tpu_custom_call.1} parent=1 // pred_check
      _
    $region19: #{tpu_custom_call.1} parent=1 // pred_check_branch
      %31 = sbr.rel (0) target = $region21
    $region20: #{tpu_custom_call.1} parent=1 // pred_region
      _
    $region21: #{tpu_custom_call.1} parent=1 // pred_fallthru
      _
    // Predicated region
    $region22: #{tpu_custom_call.1} parent=1 // pred_check
      _
    $region23: #{tpu_custom_call.1} parent=1 // pred_check_branch
      %33 = sbr.rel (0) target = $region25
    $region24: #{tpu_custom_call.1} parent=1 // pred_region
      %34 = dma.done [#allocation3], 2048
    $region25: #{tpu_custom_call.1} parent=1 // pred_fallthru
      _
    %v35 = vld [vmem:[%s0] sm:$0xff]
    %v36 = vld [vmem:[%s1] sm:$0x7]
    %v37 = vld [vmem:[%s2] sm:$0x1]
    %39 = vset.pattern.permute.xlu0 0
    %40 = vperm.xlu0 %39, %v35
    %v41 = vpop.permute.xlu0 %40
    %v43 = vlaneseq
    %v44 = vshrl.u32 %v43, 7
    %v45 = vsub.s32 0, %v44
    %v46 = vrot.slane %v36, %v45
    %v47 = vmul.f32 %v41, %v46
    %v49 = vlaneseq
    %v50 = vshrl.u32 %v49, 7
    %v51 = vsub.s32 0, %v50
    %v52 = vrot.slane %v37, %v51
    %v54 = vadd.f32 %v52, %v47
    %55 = vset.pattern.permute.xlu0 1
    %56 = vperm.xlu0 %55, %v35
    %v57 = vpop.permute.xlu0 %56
    %v59 = vlaneseq
    %v60 = vshrl.u32 %v59, 7
    %v61 = vsub.s32 1, %v60
    %v62 = vrot.slane %v36, %v61
    %v63 = vmul.f32 %v57, %v62
    %v64 = vadd.f32 %v54, %v63
    %65 = vset.pattern.permute.xlu0 2
    %66 = vperm.xlu0 %65, %v35
    %v67 = vpop.permute.xlu0 %66
    %v69 = vlaneseq
    %v70 = vshrl.u32 %v69, 7
    %v71 = vsub.s32 2, %v70
    %v72 = vrot.slane %v36, %v71
    %v73 = vmul.f32 %v67, %v72
    %v74 = vadd.f32 %v64, %v73
    %v75 = vmax.f32 %v74, 0.0
    %v76 = vld [vmem:[#allocation2] sm:$0xff]
    %v77 = vld [vmem:[#allocation2 + $0x8] sm:$0xff]
    %v78 = vld [vmem:[#allocation2 + $0x10] sm:$0xff]
    %v79 = vld [vmem:[#allocation2 + $0x18] sm:$0xff]
    %v80 = vld [vmem:[#allocation2 + $0x20] sm:$0xff]
    %v81 = vld [vmem:[#allocation2 + $0x28] sm:$0xff]
    %v82 = vld [vmem:[#allocation2 + $0x30] sm:$0xff]
    %v83 = vld [vmem:[#allocation2 + $0x38] sm:$0xff]
    %v84 = vld [vmem:[#allocation2 + $0x40] sm:$0xff]
    %v85 = vld [vmem:[#allocation2 + $0x48] sm:$0xff]
    %v86 = vld [vmem:[#allocation2 + $0x50] sm:$0xff]
    %v87 = vld [vmem:[#allocation2 + $0x58] sm:$0xff]
    %v88 = vld [vmem:[#allocation2 + $0x60] sm:$0xff]
    %v89 = vld [vmem:[#allocation2 + $0x68] sm:$0xff]
    %v90 = vld [vmem:[#allocation2 + $0x70] sm:$0xff]
    %v91 = vld [vmem:[#allocation2 + $0x78] sm:$0xff]
    %v92 = vld [vmem:[%s4] sm:$0x1]
    %v94 = vlaneseq
    %v95 = vshrl.u32 %v94, 7
    %v96 = vsub.s32 0, %v95
    %v97 = vrot.slane %v92, %v96
    %99 = vmatprep.subr.mxu0 0.0
    %100 = vmatpush1.msra.mxu0 %v76
    %101 = vmatprep.subr.mxu0 0.0
    %102 = vmatpush1.msra.mxu0 %v77
    %103 = vmatprep.subr.mxu0 0.0
    %104 = vmatpush1.msra.mxu0 %v78
    %105 = vmatprep.subr.mxu0 0.0
    %106 = vmatpush1.msra.mxu0 %v79
    %107 = vmatprep.subr.mxu0 0.0
    %108 = vmatpush1.msra.mxu0 %v80
    %109 = vmatprep.subr.mxu0 0.0
    %110 = vmatpush1.msra.mxu0 %v81
    %111 = vmatprep.subr.mxu0 0.0
    %112 = vmatpush1.msra.mxu0 %v82
    %113 = vmatprep.subr.mxu0 0.0
    %114 = vmatpush1.msra.mxu0 %v83
    %115 = vmatprep.subr.mxu0 0.0
    %116 = vmatpush1.msra.mxu0 %v84
    %117 = vmatprep.subr.mxu0 0.0
    %118 = vmatpush1.msra.mxu0 %v85
    %119 = vmatprep.subr.mxu0 0.0
    %120 = vmatpush1.msra.mxu0 %v86
    %121 = vmatprep.subr.mxu0 0.0
    %122 = vmatpush1.msra.mxu0 %v87
    %123 = vmatprep.subr.mxu0 0.0
    %124 = vmatpush1.msra.mxu0 %v88
    %125 = vmatprep.subr.mxu0 0.0
    %126 = vmatpush1.msra.mxu0 %v89
    %127 = vmatprep.subr.mxu0 0.0
    %128 = vmatpush1.msra.mxu0 %v90
    %129 = vmatprep.subr.mxu0 0.0
    %130 = vmatpush1.msra.mxu0 %v91
    %131 = vmatprep.subr.mxu0 0.0
    %132 = vmatpush1.msra.mxu0 0.0
    %133 = vmatprep.subr.mxu0 0.0
    %134 = vmatpush1.msra.mxu0 0.0
    %135 = vmatprep.subr.mxu0 0.0
    %136 = vmatpush1.msra.mxu0 0.0
    %137 = vmatprep.subr.mxu0 0.0
    %138 = vmatpush1.msra.mxu0 0.0
    %139 = vmatprep.subr.mxu0 0.0
    %140 = vmatpush1.msra.mxu0 0.0
    %141 = vmatprep.subr.mxu0 0.0
    %142 = vmatpush1.msra.mxu0 0.0
    %143 = vmatprep.subr.mxu0 0.0
    %144 = vmatpush1.msra.mxu0 0.0
    %145 = vmatprep.subr.mxu0 0.0
    %146 = vmatpush1.msra.mxu0 0.0
    %147 = vmatprep.subr.mxu0 0.0
    %148 = vmatpush1.msra.mxu0 0.0
    %149 = vmatprep.subr.mxu0 0.0
    %150 = vmatpush1.msra.mxu0 0.0
    %151 = vmatprep.subr.mxu0 0.0
    %152 = vmatpush1.msra.mxu0 0.0
    %153 = vmatprep.subr.mxu0 0.0
    %154 = vmatpush1.msra.mxu0 0.0
    %155 = vmatprep.subr.mxu0 0.0
    %156 = vmatpush1.msra.mxu0 0.0
    %157 = vmatprep.subr.mxu0 0.0
    %158 = vmatpush1.msra.mxu0 0.0
    %159 = vmatprep.subr.mxu0 0.0
    %160 = vmatpush1.msra.mxu0 0.0
    %161 = vmatprep.subr.mxu0 0.0
    %162 = vmatpush1.msra.mxu0 0.0
    %163 = vmatprep.mubr.f32.mxu0 0.0
    %164 = vmatmul.mubr.f32.gmra.mrb[0].mxu0 %v75
    %v165 = vpop.f32.mrb[0].mxu0
    %v166 = vadd.f32 %v97, %v165
    %v167 = vpop.f32.mrb[0].mxu0
    %168 = vdwg.mxu0
    %v169 = vlaneseq
    %v170 = vand.u32 %v169, 127
    %vm171 = vcmp.lt.s32.totalorder %v170, 4
    %v172 = vsel %vm171, %v166, -inf
    %173 = vmax.xlane.f32.xlu0 %v172
    %v174 = vpop.xlane.xlu0 %173
    %v175 = vsub.f32 %v166, %v174
    %v176 = vmul.f32 %v175, 1.442695
    %v177 = vpow.pop %v176
    %v178 = vsel %vm171, %v177, 0.0
    %179 = vadd.xlane.f32.xlu0 %v178
    %v180 = vpop.xlane.xlu0 %179
    %v181 = vrcp.pop %v180
    %v182 = vmul.f32 %v178, %v181
    %vm183 = vcmp.eq.s32.totalorder %v170, 4
    %v184 = vsel %vm183, %v166, 0.0
    %v185 = vadd.f32 %v182, %v184
    %186 = vst [vmem:[#allocation5] sm:$0xff] %v185
    // Predicated region
    $region26: #{tpu_custom_call.1} parent=1 // pred_check
      _
    $region27: #{tpu_custom_call.1} parent=1 // pred_check_branch
      %188 = sbr.rel (0) target = $region29
    $region28: #{tpu_custom_call.1} parent=1 // pred_region
      %s190 = ssub.s32 128, 128
      %191 = vsyncadd [#allocation4], %s190
      %s193 = sshll.u32 [#allocation5], 4
      %s194 = int_to_ptr.vmem [resolvable:$true] %s193
      %196 = dma.vmem_to_hbm [thread:$0]  %s194, 128, %s5, [#allocation4]
    $region29: #{tpu_custom_call.1} parent=1 // pred_fallthru
      _
    // Predicated region
    $region30: #{tpu_custom_call.1} parent=1 // pred_check
      _
    $region31: #{tpu_custom_call.1} parent=1 // pred_check_branch
      %198 = sbr.rel (0) target = $region33
    $region32: #{tpu_custom_call.1} parent=1 // pred_region
      %199 = dma.done [#allocation4], 128
    $region33: #{tpu_custom_call.1} parent=1 // pred_fallthru
      _
    %200 = vsyncpa [#allocation3], 1
    %201 = vsyncpa [#allocation4], 1

</llo_original>
